<compile_context>
chip_gen: v7x
topology: tpu7x:2x2x1
jax: 0.10.0
libtpu: 0.0.40
codegen_flags: <defaults>
</compile_context>

<pallas_src>
import functools

import jax
import jax.numpy as jnp
from jax.experimental import pallas as pl
from jax.experimental.pallas import tpu as pltpu


# ---------------------------------------------------------------------------
# Fused kernel: whole tower on one batch tile.
# ---------------------------------------------------------------------------
def _tower_kernel(*refs, num_hidden, has_output_layer):
    x_ref, o_ref = refs[0], refs[-1]
    p = refs[1:-1]

    # Input tile arrives in its HBM dtype (e.g. f32); cast to bf16 on the VPU
    # here instead of a separate XLA pre-pass (saves one full HBM round-trip).
    h = x_ref[...].astype(jnp.bfloat16)              # (B_TILE, in_dim)
    for l in range(num_hidden):
        w = p[2 * l][...]                            # (in, out)  bf16, BN folded
        b = p[2 * l + 1][...]                        # (1, out)   f32,  BN folded
        y = jnp.dot(h, w, preferred_element_type=jnp.float32) + b
        h = jnp.maximum(y, 0.0).astype(jnp.bfloat16)
        # Dropout: identity in eval mode.

    if has_output_layer:
        # w_out is padded to 8 sublanes (row 0 holds the real weight) so the
        # MXU operand is a full sublane group.
        w_out = p[2 * num_hidden][...]               # (8, H_last) bf16
        b_out = p[2 * num_hidden + 1][...]           # (1, 1) f32
        # Contract the feature (lane) axis of both operands -> (8, B_TILE):
        # batch lands on the lane axis => lane-dense store of the final output.
        y = jax.lax.dot_general(
            w_out, h, (((1,), (1,)), ((), ())),
            preferred_element_type=jnp.float32)
        y = y[0:1, :] + b_out                        # (1, B_TILE)
        o_ref[...] = y.reshape(o_ref.shape).astype(o_ref.dtype)
    else:
        o_ref[...] = h.astype(o_ref.dtype)           # bf16 writeback


# ---------------------------------------------------------------------------
# One-time parameter prep: fold BN + bias into the Linear weights, cast bf16.
# ---------------------------------------------------------------------------
def fold_tower_params(hidden_params, out_params, eps=1e-5):
    hidden = []
    for p in hidden_params:
        scale = p["gamma"] * jax.lax.rsqrt(p["var"] + eps)             # (1, h)
        w = (p["w"] * scale).astype(jnp.bfloat16)                      # (in, h)
        b = ((p["b"] - p["mean"]) * scale + p["beta"]).astype(jnp.float32)
        hidden.append((w, b))
    out = None
    if out_params is not None:
        w_row = out_params["w"].T                                      # (1, H_last)
        w_row = jnp.pad(w_row, ((0, 7), (0, 0))).astype(jnp.bfloat16)  # (8, H_last)
        out = (w_row, out_params["b"].astype(jnp.float32))             # (1, 1)
    return {"hidden": hidden, "out": out}


def _const_map(ndim):
    return lambda i: (0,) * ndim


def _pick_b_tile(batch, requested):
    """Multiple of 128; >= 2 grid steps when the batch allows (v7x megacore)."""
    bt = max(128, (int(requested) // 128) * 128)
    if batch > 128:
        bt = min(bt, max(128, ((batch - 1) // 128) * 128))
    return bt


# ---------------------------------------------------------------------------
# Forward wrapper: batch-tiled, single pallas_call.
# ---------------------------------------------------------------------------
def tower_forward(x, folded, *, b_tile=512):
    B, in_dim = x.shape
    hidden = folded["hidden"]
    out = folded["out"]
    num_hidden = len(hidden)
    has_out = out is not None
    h_last = hidden[-1][0].shape[1] if num_hidden else in_dim

    bt = _pick_b_tile(B, b_tile)
    num_tiles = pl.cdiv(B, bt)

    flat_params = []
    for w, b in hidden:
        flat_params += [w, b]
    if has_out:
        flat_params += [out[0], out[1]]

    # x streamed per batch tile (boundary block handles a ragged last tile);
    # weights/biases use constant index maps -> DMA'd once, VMEM resident.
    in_specs = [pl.BlockSpec((bt, in_dim), lambda i: (i, 0))]
    in_specs += [pl.BlockSpec(a.shape, _const_map(a.ndim)) for a in flat_params]

    if has_out:
        # Lane-dense output: batch on the lane axis, one (1, 1, B_TILE) tile
        # per grid step; reshaped back to (B, 1) below.
        out_shape = jax.ShapeDtypeStruct((num_tiles, 1, bt), jnp.float32)
        out_specs = pl.BlockSpec((1, 1, bt), lambda i: (i, 0, 0))
        out_tile_bytes = bt * 4
    else:
        # Hidden activations as the output: emit bf16 to halve HBM writeback.
        out_shape = jax.ShapeDtypeStruct((B, h_last), jnp.bfloat16)
        out_specs = pl.BlockSpec((bt, h_last), lambda i: (i, 0))
        out_tile_bytes = bt * h_last * 2

    # Explicit scoped-VMEM budget: double-buffered x tile + params (default
    # double-buffered) + double-buffered output tile + activation working set,
    # plus headroom; clamped to v7x's 64 MiB physical VMEM.
    param_bytes = sum(int(a.size) * a.dtype.itemsize for a in flat_params)
    act_dims = [in_dim] + [w.shape[1] for w, _ in hidden]
    est = (2 * bt * in_dim * x.dtype.itemsize
           + 2 * param_bytes
           + 2 * out_tile_bytes
           + 4 * bt * max(act_dims) * 4)
    vmem_limit = int(min(max(est + (8 << 20), 16 << 20), 64 << 20))

    y = pl.pallas_call(
        functools.partial(_tower_kernel, num_hidden=num_hidden,
                          has_output_layer=has_out),
        out_shape=out_shape,
        grid=(num_tiles,),
        in_specs=in_specs,
        out_specs=out_specs,
        compiler_params=pltpu.CompilerParams(
            dimension_semantics=("parallel",),
            vmem_limit_bytes=vmem_limit),
    )(x, *flat_params)

    if has_out:
        return y.reshape(num_tiles * bt, 1)[:B]
    return y


# ---------------------------------------------------------------------------
# Parameter construction (deterministic) + pure-JAX reference.
# ---------------------------------------------------------------------------
def init_tower_params(key, input_dim, hidden_dims, output_layer=True):
    params = []
    in_dim = input_dim
    for h in hidden_dims:
        key, k_w, k_b, k_g, k_be, k_m, k_v = jax.random.split(key, 7)
        layer = {
            # stored as (in_dim, out_dim) == pytorch weight.T
            "w": jax.random.normal(k_w, (in_dim, h), jnp.float32) * 0.05,
            "b": jax.random.normal(k_b, (1, h), jnp.float32) * 0.05,
            "gamma": 1.0 + 0.1 * jax.random.normal(k_g, (1, h), jnp.float32),
            "beta": 0.1 * jax.random.normal(k_be, (1, h), jnp.float32),
            "mean": 0.1 * jax.random.normal(k_m, (1, h), jnp.float32),
            "var": jnp.abs(jax.random.normal(k_v, (1, h), jnp.float32)) + 0.5,
        }
        params.append(layer)
        in_dim = h
    out = None
    if output_layer:
        key, k_w, k_b = jax.random.split(key, 3)
        out = {
            "w": jax.random.normal(k_w, (in_dim, 1), jnp.float32) * 0.05,
            "b": jax.random.normal(k_b, (1, 1), jnp.float32) * 0.05,
        }
    return params, out


def tower_forward_ref(x, hidden_params, out_params, eps=1e-5):
    h = x
    for p in hidden_params:
        y = h @ p["w"] + p["b"]
        y = (y - p["mean"]) / jnp.sqrt(p["var"] + eps) * p["gamma"] + p["beta"]
        h = jnp.maximum(y, 0.0)
    if out_params is not None:
        h = h @ out_params["w"] + out_params["b"]
    return h


if __name__ == "__main__":
    key = jax.random.PRNGKey(0)
    batch = 200                 # ragged on purpose (2 tiles of 128, last partial)
    input_dim = 32
    hidden_dims = [64, 32]

    k_param, k_x = jax.random.split(key)
    hidden_params, out_params = init_tower_params(
        k_param, input_dim, hidden_dims, output_layer=True)
    x = jax.random.normal(k_x, (batch, input_dim), jnp.float32)

    fwd = jax.jit(tower_forward)

    # --- output_layer=True path (scored tower) -----------------------------
    folded = fold_tower_params(hidden_params, out_params)   # one-time, offline
    y = jax.block_until_ready(fwd(x, folded))
    y_ref = tower_forward_ref(x, hidden_params, out_params)
    assert y.shape == (batch, 1), y.shape
    max_err = float(jnp.max(jnp.abs(y - y_ref)))
    assert jnp.allclose(y, y_ref, atol=1e-2, rtol=1e-2), (max_err, y[:4], y_ref[:4])

    # --- output_layer=False path (bf16 activation output, masked ragged tile)
    folded_h = fold_tower_params(hidden_params, None)
    y2 = jax.block_until_ready(fwd(x, folded_h))
    y2_ref = tower_forward_ref(x, hidden_params, None)
    assert y2.shape == (batch, hidden_dims[-1]), y2.shape
    max_err2 = float(jnp.max(jnp.abs(y2.astype(jnp.float32) - y2_ref)))
    assert jnp.allclose(y2.astype(jnp.float32), y2_ref, atol=5e-2, rtol=5e-2), max_err2

    print("KERNEL_OK")
</pallas_src>

<mosaic_0001>
module attributes {stable_mosaic.version = 11 : i64} {
  func.func @_tower_kernel(%arg0: i32, %arg1: memref<128x32xf32, #tpu.memory_space<vmem>>, %arg2: memref<32x64xbf16, #tpu.memory_space<vmem>>, %arg3: memref<1x64xf32, #tpu.memory_space<vmem>>, %arg4: memref<64x32xbf16, #tpu.memory_space<vmem>>, %arg5: memref<1x32xf32, #tpu.memory_space<vmem>>, %arg6: memref<8x32xbf16, #tpu.memory_space<vmem>>, %arg7: memref<1x1xf32, #tpu.memory_space<vmem>>, %arg8: memref<1x1x128xf32, #tpu.memory_space<vmem>>) attributes {dimension_semantics = [#tpu.dimension_semantics<parallel>], iteration_bounds = array<i64: 2>, scalar_prefetch = 0 : i64, scratch_operands = 0 : i64, tpu.core_type = #tpu.core_type<tc>, window_params = [{transform_indices = @transform_0, window_bounds = array<i64: 128, 32>}, {pipeline_mode = #tpu.pipeline_mode<synchronous>, transform_indices = @transform_1, window_bounds = array<i64: 32, 64>}, {pipeline_mode = #tpu.pipeline_mode<synchronous>, transform_indices = @transform_2, window_bounds = array<i64: 1, 64>}, {pipeline_mode = #tpu.pipeline_mode<synchronous>, transform_indices = @transform_3, window_bounds = array<i64: 64, 32>}, {pipeline_mode = #tpu.pipeline_mode<synchronous>, transform_indices = @transform_4, window_bounds = array<i64: 1, 32>}, {pipeline_mode = #tpu.pipeline_mode<synchronous>, transform_indices = @transform_5, window_bounds = array<i64: 8, 32>}, {pipeline_mode = #tpu.pipeline_mode<synchronous>, transform_indices = @transform_6, window_bounds = array<i64: 1, 1>}, {transform_indices = @transform_7, window_bounds = array<i64: 1, 1, 128>}]} {
    %c0 = arith.constant 0 : index
    %c0_0 = arith.constant 0 : index
    %0 = vector.load %arg1[%c0, %c0_0] : memref<128x32xf32, #tpu.memory_space<vmem>>, vector<128x32xf32>
    %1 = arith.truncf %0 : vector<128x32xf32> to vector<128x32xbf16>
    %c0_1 = arith.constant 0 : index
    %c0_2 = arith.constant 0 : index
    %2 = vector.load %arg2[%c0_1, %c0_2] : memref<32x64xbf16, #tpu.memory_space<vmem>>, vector<32x64xbf16>
    %c0_3 = arith.constant 0 : index
    %c0_4 = arith.constant 0 : index
    %3 = vector.load %arg3[%c0_3, %c0_4] : memref<1x64xf32, #tpu.memory_space<vmem>>, vector<1x64xf32>
    %cst = arith.constant dense<0.000000e+00> : vector<128x64xf32>
    %4 = tpu.matmul %1, %2, %cst {dimension_numbers = #tpu.dot_dimension_numbers<[1], [0], [0], [1], [0, 0, 1, 1], [], []>} : vector<128x32xbf16>, vector<32x64xbf16>, vector<128x64xf32> -> vector<128x64xf32>
    %5 = vector.broadcast %3 : vector<1x64xf32> to vector<128x64xf32>
    %6 = arith.addf %4, %5 : vector<128x64xf32>
    %cst_5 = arith.constant 0.000000e+00 : f32
    %7 = vector.broadcast %cst_5 : f32 to vector<128x64xf32>
    %8 = arith.maximumf %6, %7 : vector<128x64xf32>
    %9 = arith.truncf %8 : vector<128x64xf32> to vector<128x64xbf16>
    %c0_6 = arith.constant 0 : index
    %c0_7 = arith.constant 0 : index
    %10 = vector.load %arg4[%c0_6, %c0_7] : memref<64x32xbf16, #tpu.memory_space<vmem>>, vector<64x32xbf16>
    %c0_8 = arith.constant 0 : index
    %c0_9 = arith.constant 0 : index
    %11 = vector.load %arg5[%c0_8, %c0_9] : memref<1x32xf32, #tpu.memory_space<vmem>>, vector<1x32xf32>
    %cst_10 = arith.constant dense<0.000000e+00> : vector<128x32xf32>
    %12 = tpu.matmul %9, %10, %cst_10 {dimension_numbers = #tpu.dot_dimension_numbers<[1], [0], [0], [1], [0, 0, 1, 1], [], []>} : vector<128x64xbf16>, vector<64x32xbf16>, vector<128x32xf32> -> vector<128x32xf32>
    %13 = vector.broadcast %11 : vector<1x32xf32> to vector<128x32xf32>
    %14 = arith.addf %12, %13 : vector<128x32xf32>
    %cst_11 = arith.constant 0.000000e+00 : f32
    %15 = vector.broadcast %cst_11 : f32 to vector<128x32xf32>
    %16 = arith.maximumf %14, %15 : vector<128x32xf32>
    %17 = arith.truncf %16 : vector<128x32xf32> to vector<128x32xbf16>
    %c0_12 = arith.constant 0 : index
    %c0_13 = arith.constant 0 : index
    %18 = vector.load %arg6[%c0_12, %c0_13] : memref<8x32xbf16, #tpu.memory_space<vmem>>, vector<8x32xbf16>
    %c0_14 = arith.constant 0 : index
    %c0_15 = arith.constant 0 : index
    %19 = vector.load %arg7[%c0_14, %c0_15] : memref<1x1xf32, #tpu.memory_space<vmem>>, vector<1x1xf32>
    %cst_16 = arith.constant dense<0.000000e+00> : vector<8x128xf32>
    %20 = tpu.matmul %18, %17, %cst_16 {dimension_numbers = #tpu.dot_dimension_numbers<[1], [1], [0], [0], [0, 0, 1, 0], [], []>} : vector<8x32xbf16>, vector<128x32xbf16>, vector<8x128xf32> -> vector<8x128xf32>
    %21 = vector.extract_strided_slice %20 {offsets = [0, 0], sizes = [1, 128], strides = [1, 1]} : vector<8x128xf32> to vector<1x128xf32>
    %22 = vector.broadcast %19 : vector<1x1xf32> to vector<1x128xf32>
    %23 = arith.addf %21, %22 : vector<1x128xf32>
    %24 = vector.shape_cast %23 : vector<1x128xf32> to vector<1x1x128xf32>
    %c0_17 = arith.constant 0 : index
    %c0_18 = arith.constant 0 : index
    %c0_19 = arith.constant 0 : index
    %25 = vector.load %arg8[%c0_17, %c0_18, %c0_19] : memref<1x1x128xf32, #tpu.memory_space<vmem>>, vector<1x1x128xf32>
    tpu.vector_store %arg8[%c0_17, %c0_18, %c0_19], %24 {strides = array<i32>} : memref<1x1x128xf32, #tpu.memory_space<vmem>>, vector<1x1x128xf32>,
    return
  }
  func.func @transform_0(%arg0: i32) -> (i32, i32) {
    %c0_i32 = arith.constant 0 : i32
    %c0_i32_0 = arith.constant 0 : i32
    return %arg0, %c0_i32 : i32, i32
  }
  func.func @transform_1(%arg0: i32) -> (i32, i32) {
    %c0_i32 = arith.constant 0 : i32
    %c0_i32_0 = arith.constant 0 : i32
    %c0_i32_1 = arith.constant 0 : i32
    return %c0_i32, %c0_i32_0 : i32, i32
  }
  func.func @transform_2(%arg0: i32) -> (i32, i32) {
    %c0_i32 = arith.constant 0 : i32
    %c0_i32_0 = arith.constant 0 : i32
    %c0_i32_1 = arith.constant 0 : i32
    return %c0_i32, %c0_i32_0 : i32, i32
  }
  func.func @transform_3(%arg0: i32) -> (i32, i32) {
    %c0_i32 = arith.constant 0 : i32
    %c0_i32_0 = arith.constant 0 : i32
    %c0_i32_1 = arith.constant 0 : i32
    return %c0_i32, %c0_i32_0 : i32, i32
  }
  func.func @transform_4(%arg0: i32) -> (i32, i32) {
    %c0_i32 = arith.constant 0 : i32
    %c0_i32_0 = arith.constant 0 : i32
    %c0_i32_1 = arith.constant 0 : i32
    return %c0_i32, %c0_i32_0 : i32, i32
  }
  func.func @transform_5(%arg0: i32) -> (i32, i32) {
    %c0_i32 = arith.constant 0 : i32
    %c0_i32_0 = arith.constant 0 : i32
    %c0_i32_1 = arith.constant 0 : i32
    return %c0_i32, %c0_i32_0 : i32, i32
  }
  func.func @transform_6(%arg0: i32) -> (i32, i32) {
    %c0_i32 = arith.constant 0 : i32
    %c0_i32_0 = arith.constant 0 : i32
    %c0_i32_1 = arith.constant 0 : i32
    return %c0_i32, %c0_i32_0 : i32, i32
  }
  func.func @transform_7(%arg0: i32) -> (i32, i32, i32) {
    %c0_i32 = arith.constant 0 : i32
    %c0_i32_0 = arith.constant 0 : i32
    %c0_i32_1 = arith.constant 0 : i32
    return %arg0, %c0_i32, %c0_i32_0 : i32, i32, i32
  }
}

</mosaic_0001>

<llo_original>
// kernel: tower_forward.1
$region0: #{tower_forward.1}
  #allocation0 [shape = 'u32[]', space=smem, size = 0x4, offset = 0x4, fixed_abs, tag = 'smem constant byte address 0x4 - core index']
  #allocation1 [shape = 'u32[144,128]{1,0:T(1,128)}', space=vmem, size = 0x12000, scoped, tag = 'internal scratch']
  #allocation2 [shape = 'f32[1,1]{1,0:T(1,128)S(1)}', space=vmem, size = 0x200, scoped, tag = 'scoped memory for tower_forward.1']
  %s0 = inlined_call_operand.vmem [shape: f32[200,32], index: 0, kind: input, shape index: {}]
  %s1 = inlined_call_operand.vmem [shape: bf16[32,64], index: 1, kind: input, shape index: {}]
  %s2 = inlined_call_operand.vmem [shape: f32[1,64], index: 2, kind: input, shape index: {}]
  %s3 = inlined_call_operand.vmem [shape: bf16[64,32], index: 3, kind: input, shape index: {}]
  %s4 = inlined_call_operand.vmem [shape: f32[1,32], index: 4, kind: input, shape index: {}]
  %s5 = inlined_call_operand.vmem [shape: bf16[8,32], index: 5, kind: input, shape index: {}]
  %s6 = inlined_call_operand.<no memory space> [shape: f32[1,1], index: 6, kind: input, shape index: {}]
  %s7 = inlined_call_operand.hbm [shape: f32[2,1,128], index: 7, kind: output, shape index: {}]
  %s8 = sld [smem:[#allocation0]]
  $region61: #{tower_forward.1} parent=0
    _
  %s10 = ssub.s32 1, %s8
  %s11 = scalar_select 0, %s10, %s8
  %v12 = vstv %s6
  %13 = vst [vmem:[#allocation2] sm:$0x1] %v12
  $region1: #{tower_forward.1} parent=0
    #allocation3 [shape = 'u8[1024]{0}', space=vmem, size = 0x400, scoped, tag = 'output window, operand 0']
    #allocation4 [shape = 's32[2]{0}', space=sflag, size = 0x8, scoped, tag = 'scoped memory for tower_forward.1']
    %14 = vsyncpa [#allocation4], 0
    %s15 = scalar_lea.sflag [#allocation4], 1
    %16 = vsyncpa %s15, 0
    loop: start=0, step=1, limit=4
    $region2: #{tower_forward.1} parent=1 // loop_pre_header
      _
    $region3: #{tower_forward.1} parent=1 // loop_header
      %s18 = sphi 0, %s22
      %p19 = scmp.ge.s32.totalorder %s18, 4
      %s28 = sphi 0, %s30
      %s31 = sphi 0, %s28
      %s32 = sphi 0, %s31
      %s48 = sphi 0, %s32
      %s52 = sphi 0, %s52
      %s54 = sphi 0, %s52
      %s55 = sphi 0, %s54
      %s69 = sphi 0, %s55
      %s73 = sphi 0, %s73
      %s75 = sphi 0, %s73
      %s76 = sphi 0, %s75
      %s90 = sphi 0, %s76
      %s94 = sphi 0, %s94
      %s96 = sphi 0, %s94
      %s97 = sphi 0, %s96
      %s111 = sphi 0, %s97
      %s115 = sphi 0, %s115
      %s117 = sphi 0, %s115
      %s118 = sphi 0, %s117
      %s132 = sphi 0, %s118
      %s136 = sphi 0, %s136
      %s138 = sphi 0, %s136
      %s139 = sphi 0, %s138
      %s153 = sphi 0, %s139
      %s157 = sphi 0, %s157
      %s159 = sphi 0, %s157
      %s160 = sphi 0, %s159
      %s174 = sphi 0, %s160
      %s180 = sphi 0, %s182
      %s183 = sphi 0, %s180
      %s184 = sphi 0, %s183
      %s200 = sphi 0, %s184
    $region4: #{tower_forward.1} parent=1 // loop_header_branch
      %21 = sbr.rel (%p19) target = $region8
    $region5: #{tower_forward.1} parent=1 // loop_body
      %s23 = ssub.s32 %s18, 1
      %s24 = ssub.s32 %s18, 2
      %s25 = sadd.s32 %s18, 1
      %s26 = ssub.s32 %s18, %s25
      %p27 = scmp.eq.s32.totalorder %s26, 0
      %s29 = sadd.s32 %s28, 1
      %s30 = scalar_select %p27, %s28, %s29
      %p33 = pneg %p27
      %p34 = scmp.eq.s32.totalorder %s18, 1
      %p35 = por %p33, %p34
      %p36 = scmp.ne.s32.totalorder %s28, %s31
      %p37 = scmp.eq.s32.totalorder %s18, 0
      %p38 = por %p36, %p37
      %p39 = scmp.ne.s32.totalorder %s28, %s31
      %p40 = scmp.eq.s32.totalorder %s23, 1
      %p41 = por %p39, %p40
      %p42 = scmp.ne.s32.totalorder %s31, %s32
      %p43 = scmp.eq.s32.totalorder %s23, 0
      %p44 = por %p42, %p43
      %p45 = scmp.ne.s32.totalorder %s31, %s32
      %p46 = scmp.eq.s32.totalorder %s24, 1
      %p47 = por %p45, %p46
      %p49 = scmp.ne.s32.totalorder %s32, %s48
      %p50 = scmp.eq.s32.totalorder %s24, 0
      %p51 = por %p49, %p50
      %s53 = sadd.s32 %s52, 1
      %p56 = scmp.eq.s32.totalorder %s18, 1
      %p57 = scmp.ne.s32.totalorder %s52, %s54
      %p58 = scmp.eq.s32.totalorder %s18, 0
      %p59 = por %p57, %p58
      %p60 = scmp.ne.s32.totalorder %s52, %s54
      %p61 = scmp.eq.s32.totalorder %s23, 1
      %p62 = por %p60, %p61
      %p63 = scmp.ne.s32.totalorder %s54, %s55
      %p64 = scmp.eq.s32.totalorder %s23, 0
      %p65 = por %p63, %p64
      %p66 = scmp.ne.s32.totalorder %s54, %s55
      %p67 = scmp.eq.s32.totalorder %s24, 1
      %p68 = por %p66, %p67
      %p70 = scmp.ne.s32.totalorder %s55, %s69
      %p71 = scmp.eq.s32.totalorder %s24, 0
      %p72 = por %p70, %p71
      %s74 = sadd.s32 %s73, 1
      %p77 = scmp.eq.s32.totalorder %s18, 1
      %p78 = scmp.ne.s32.totalorder %s73, %s75
      %p79 = scmp.eq.s32.totalorder %s18, 0
      %p80 = por %p78, %p79
      %p81 = scmp.ne.s32.totalorder %s73, %s75
      %p82 = scmp.eq.s32.totalorder %s23, 1
      %p83 = por %p81, %p82
      %p84 = scmp.ne.s32.totalorder %s75, %s76
      %p85 = scmp.eq.s32.totalorder %s23, 0
      %p86 = por %p84, %p85
      %p87 = scmp.ne.s32.totalorder %s75, %s76
      %p88 = scmp.eq.s32.totalorder %s24, 1
      %p89 = por %p87, %p88
      %p91 = scmp.ne.s32.totalorder %s76, %s90
      %p92 = scmp.eq.s32.totalorder %s24, 0
      %p93 = por %p91, %p92
      %s95 = sadd.s32 %s94, 1
      %p98 = scmp.eq.s32.totalorder %s18, 1
      %p99 = scmp.ne.s32.totalorder %s94, %s96
      %p100 = scmp.eq.s32.totalorder %s18, 0
      %p101 = por %p99, %p100
      %p102 = scmp.ne.s32.totalorder %s94, %s96
      %p103 = scmp.eq.s32.totalorder %s23, 1
      %p104 = por %p102, %p103
      %p105 = scmp.ne.s32.totalorder %s96, %s97
      %p106 = scmp.eq.s32.totalorder %s23, 0
      %p107 = por %p105, %p106
      %p108 = scmp.ne.s32.totalorder %s96, %s97
      %p109 = scmp.eq.s32.totalorder %s24, 1
      %p110 = por %p108, %p109
      %p112 = scmp.ne.s32.totalorder %s97, %s111
      %p113 = scmp.eq.s32.totalorder %s24, 0
      %p114 = por %p112, %p113
      %s116 = sadd.s32 %s115, 1
      %p119 = scmp.eq.s32.totalorder %s18, 1
      %p120 = scmp.ne.s32.totalorder %s115, %s117
      %p121 = scmp.eq.s32.totalorder %s18, 0
      %p122 = por %p120, %p121
      %p123 = scmp.ne.s32.totalorder %s115, %s117
      %p124 = scmp.eq.s32.totalorder %s23, 1
      %p125 = por %p123, %p124
      %p126 = scmp.ne.s32.totalorder %s117, %s118
      %p127 = scmp.eq.s32.totalorder %s23, 0
      %p128 = por %p126, %p127
      %p129 = scmp.ne.s32.totalorder %s117, %s118
      %p130 = scmp.eq.s32.totalorder %s24, 1
      %p131 = por %p129, %p130
      %p133 = scmp.ne.s32.totalorder %s118, %s132
      %p134 = scmp.eq.s32.totalorder %s24, 0
      %p135 = por %p133, %p134
      %s137 = sadd.s32 %s136, 1
      %p140 = scmp.eq.s32.totalorder %s18, 1
      %p141 = scmp.ne.s32.totalorder %s136, %s138
      %p142 = scmp.eq.s32.totalorder %s18, 0
      %p143 = por %p141, %p142
      %p144 = scmp.ne.s32.totalorder %s136, %s138
      %p145 = scmp.eq.s32.totalorder %s23, 1
      %p146 = por %p144, %p145
      %p147 = scmp.ne.s32.totalorder %s138, %s139
      %p148 = scmp.eq.s32.totalorder %s23, 0
      %p149 = por %p147, %p148
      %p150 = scmp.ne.s32.totalorder %s138, %s139
      %p151 = scmp.eq.s32.totalorder %s24, 1
      %p152 = por %p150, %p151
      %p154 = scmp.ne.s32.totalorder %s139, %s153
      %p155 = scmp.eq.s32.totalorder %s24, 0
      %p156 = por %p154, %p155
      %s158 = sadd.s32 %s157, 1
      %p161 = scmp.eq.s32.totalorder %s18, 1
      %p162 = scmp.ne.s32.totalorder %s157, %s159
      %p163 = scmp.eq.s32.totalorder %s18, 0
      %p164 = por %p162, %p163
      %p165 = scmp.ne.s32.totalorder %s157, %s159
      %p166 = scmp.eq.s32.totalorder %s23, 1
      %p167 = por %p165, %p166
      %p168 = scmp.ne.s32.totalorder %s159, %s160
      %p169 = scmp.eq.s32.totalorder %s23, 0
      %p170 = por %p168, %p169
      %p171 = scmp.ne.s32.totalorder %s159, %s160
      %p172 = scmp.eq.s32.totalorder %s24, 1
      %p173 = por %p171, %p172
      %p175 = scmp.ne.s32.totalorder %s160, %s174
      %p176 = scmp.eq.s32.totalorder %s24, 0
      %p177 = por %p175, %p176
      %s178 = ssub.s32 %s18, %s25
      %p179 = scmp.eq.s32.totalorder %s178, 0
      %s181 = sadd.s32 %s180, 1
      %s182 = scalar_select %p179, %s180, %s181
      %p185 = pneg %p179
      %p186 = scmp.eq.s32.totalorder %s18, 1
      %p187 = por %p185, %p186
      %p188 = scmp.ne.s32.totalorder %s180, %s183
      %p189 = scmp.eq.s32.totalorder %s18, 0
      %p190 = por %p188, %p189
      %p191 = scmp.ne.s32.totalorder %s180, %s183
      %p192 = scmp.eq.s32.totalorder %s23, 1
      %p193 = por %p191, %p192
      %p194 = scmp.ne.s32.totalorder %s183, %s184
      %p195 = scmp.eq.s32.totalorder %s23, 0
      %p196 = por %p194, %p195
      %p197 = scmp.ne.s32.totalorder %s183, %s184
      %p198 = scmp.eq.s32.totalorder %s24, 1
      %p199 = por %p197, %p198
      %p201 = scmp.ne.s32.totalorder %s184, %s200
      %p202 = scmp.eq.s32.totalorder %s24, 0
      %p203 = por %p201, %p202
      %p204 = scmp.le.s32.totalorder 1, %s18
      %p205 = scmp.lt.s32.totalorder %s18, 3
      %p206 = pnand %p204, %p205
      %p207 = pneg %p206
      // Predicated region
      $region9: #{tower_forward.1} parent=5 // pred_check
        _
      $region10: #{tower_forward.1} parent=5 // pred_check_branch
        %209 = sbr.rel (%p206) target = $region12
      $region11: #{tower_forward.1} parent=5 // pred_region
        %s210 = ssub.s32 %s18, 1
        // Predicated region
        $region13: #{tower_forward.1} parent=11 // pred_check
          %p211 = pneg %p65
        $region14: #{tower_forward.1} parent=11 // pred_check_branch
          %213 = sbr.rel (%p211) target = $region16
        $region15: #{tower_forward.1} parent=11 // pred_region
          _
        $region16: #{tower_forward.1} parent=11 // pred_fallthru
          _
        // Predicated region
        $region17: #{tower_forward.1} parent=11 // pred_check
          %p214 = pneg %p86
        $region18: #{tower_forward.1} parent=11 // pred_check_branch
          %216 = sbr.rel (%p214) target = $region20
        $region19: #{tower_forward.1} parent=11 // pred_region
          _
        $region20: #{tower_forward.1} parent=11 // pred_fallthru
          _
        // Predicated region
        $region21: #{tower_forward.1} parent=11 // pred_check
          %p217 = pneg %p107
        $region22: #{tower_forward.1} parent=11 // pred_check_branch
          %219 = sbr.rel (%p217) target = $region24
        $region23: #{tower_forward.1} parent=11 // pred_region
          _
        $region24: #{tower_forward.1} parent=11 // pred_fallthru
          _
        // Predicated region
        $region25: #{tower_forward.1} parent=11 // pred_check
          %p220 = pneg %p128
        $region26: #{tower_forward.1} parent=11 // pred_check_branch
          %222 = sbr.rel (%p220) target = $region28
        $region27: #{tower_forward.1} parent=11 // pred_region
          _
        $region28: #{tower_forward.1} parent=11 // pred_fallthru
          _
        // Predicated region
        $region29: #{tower_forward.1} parent=11 // pred_check
          %p223 = pneg %p149
        $region30: #{tower_forward.1} parent=11 // pred_check_branch
          %225 = sbr.rel (%p223) target = $region32
        $region31: #{tower_forward.1} parent=11 // pred_region
          _
        $region32: #{tower_forward.1} parent=11 // pred_fallthru
          _
        // Predicated region
        $region33: #{tower_forward.1} parent=11 // pred_check
          %p226 = pneg %p170
        $region34: #{tower_forward.1} parent=11 // pred_check_branch
          %228 = sbr.rel (%p226) target = $region36
        $region35: #{tower_forward.1} parent=11 // pred_region
          _
        $region36: #{tower_forward.1} parent=11 // pred_fallthru
          _
      $region12: #{tower_forward.1} parent=5 // pred_fallthru
        _
      %p229 = scmp.lt.s32.totalorder %s18, 2
      // Predicated region
      $region37: #{tower_forward.1} parent=5 // pred_check
        %p230 = pneg %p229
      $region38: #{tower_forward.1} parent=5 // pred_check_branch
        %232 = sbr.rel (%p230) target = $region40
      $region39: #{tower_forward.1} parent=5 // pred_region
        // Predicated region
        $region41: #{tower_forward.1} parent=39 // pred_check
          %p233 = pneg %p38
        $region42: #{tower_forward.1} parent=39 // pred_check_branch
          %235 = sbr.rel (%p233) target = $region44
        $region43: #{tower_forward.1} parent=39 // pred_region
          %s236 = smul.u32 16, %s18
          %s237 = ssub.s32 25, %s236
          %p238 = scmp.lt.s32.totalorder %s237, 16
          %s239 = scalar_select %p238, %s237, 16
          %s240 = smul.u32 128, %s239
          %p241 = scmp.lt.s32.totalorder %s236, 24
          %s242 = scalar_select %p241, %s236, 24
          %s243 = smul.addr %s242, 8
          %s244 = scalar_lea.vmem %s0, %s243
          %s245 = smul.u32 16, %s18
          %s246 = ssub.s32 25, %s245
          %p247 = scmp.lt.s32.totalorder %s246, 16
          %s248 = scalar_select %p247, %s246, 16
          %s249 = smul.u32 128, %s248
        $region44: #{tower_forward.1} parent=39 // pred_fallthru
          _
      $region40: #{tower_forward.1} parent=5 // pred_fallthru
        _
      %p250 = scmp.le.s32.totalorder 1, %s18
      %p251 = scmp.lt.s32.totalorder %s18, 3
      %p252 = pnand %p250, %p251
      %p253 = pneg %p252
      // Predicated region
      $region45: #{tower_forward.1} parent=5 // pred_check
        _
      $region46: #{tower_forward.1} parent=5 // pred_check_branch
        %255 = sbr.rel (%p252) target = $region48
      $region47: #{tower_forward.1} parent=5 // pred_region
        %s256 = ssub.s32 %s18, 1
        %s257 = smul.u32 16, %s23
        %s258 = ssub.s32 25, %s257
        %p259 = scmp.lt.s32.totalorder %s258, 16
        %s260 = scalar_select %p259, %s258, 16
        %s261 = smul.u32 128, %s260
        %p262 = scmp.lt.s32.totalorder %s257, 24
        %s263 = scalar_select %p262, %s257, 24
        %s264 = smul.addr %s263, 8
        %s265 = scalar_lea.vmem %s0, %s264
        %p266 = pneg %p44
        %p267 = pneg %p41
        %p268 = pneg %p65
        %p269 = pneg %p62
        %p270 = pneg %p86
        %p271 = pneg %p83
        %p272 = pneg %p107
        %p273 = pneg %p104
        %p274 = pneg %p128
        %p275 = pneg %p125
        %p276 = pneg %p149
        %p277 = pneg %p146
        %p278 = pneg %p170
        %p279 = pneg %p167
        %p280 = pneg %p196
        %p281 = pneg %p193
        %s282 = sand.u32 %s183, 1
        %s283 = scalar_lea.sflag [#allocation4], %s282
        %s284 = sand.u32 %s183, 1
        %s285 = scalar_lea.vmem [#allocation3], %s284
        %s286 = smul.u32 16, %s23
        %s287 = ssub.s32 25, %s286
        %p288 = scmp.lt.s32.totalorder %s287, 16
        %s289 = scalar_select %p288, %s287, 16
        %s290 = smul.u32 128, %s289
        %p291 = scmp.lt.s32.totalorder %s286, 24
        %s292 = scalar_select %p291, %s286, 24
        %s293 = smul.addr %s292, 8
        %s294 = scalar_lea.vmem %s0, %s293
        %s295 = smul.u32 16, %s23
        %s296 = ssub.s32 25, %s295
        %p297 = scmp.lt.s32.totalorder %s296, 16
        %s298 = scalar_select %p297, %s296, 16
        %s299 = smul.u32 128, %s298
        %v301 = vld [vmem:[%s294] sm:$0xff]
        %v302 = vld [vmem:[%s294 + $0x8] sm:$0xff]
        %v303 = vld [vmem:[%s294 + $0x10] sm:$0xff]
        %v304 = vld [vmem:[%s294 + $0x18] sm:$0xff]
        %v305 = vld [vmem:[%s294 + $0x20] sm:$0xff]
        %v306 = vld [vmem:[%s294 + $0x28] sm:$0xff]
        %v307 = vld [vmem:[%s294 + $0x30] sm:$0xff]
        %v308 = vld [vmem:[%s294 + $0x38] sm:$0xff]
        %v309 = vld [vmem:[%s294 + $0x40] sm:$0xff]
        %v310 = vld [vmem:[%s294 + $0x48] sm:$0xff]
        %v311 = vld [vmem:[%s294 + $0x50] sm:$0xff]
        %v312 = vld [vmem:[%s294 + $0x58] sm:$0xff]
        %v313 = vld [vmem:[%s294 + $0x60] sm:$0xff]
        %v314 = vld [vmem:[%s294 + $0x68] sm:$0xff]
        %v315 = vld [vmem:[%s294 + $0x70] sm:$0xff]
        %v316 = vld [vmem:[%s294 + $0x78] sm:$0xff]
        %v317 = vpack.c.bf16 %v302, %v301
        %v318 = vpack.c.bf16 %v304, %v303
        %v319 = vpack.c.bf16 %v306, %v305
        %v320 = vpack.c.bf16 %v308, %v307
        %v321 = vpack.c.bf16 %v310, %v309
        %v322 = vpack.c.bf16 %v312, %v311
        %v323 = vpack.c.bf16 %v314, %v313
        %v324 = vpack.c.bf16 %v316, %v315
        %v325 = vld [vmem:[%s1] sm:$0xf]
        %v326 = vld [vmem:[%s1 + $0x4] sm:$0xf]
        %v327 = vld [vmem:[%s1 + $0x8] sm:$0xf]
        %v328 = vld [vmem:[%s1 + $0xc] sm:$0xf]
        %v329 = vld [vmem:[%s2] sm:$0x1]
        %v331 = vlaneseq
        %v332 = vshrl.u32 %v331, 7
        %v333 = vsub.s32 0, %v332
        %v334 = vrot.slane %v329, %v333
        %v340 = vunpack.c.l.b16 %v325
        %v341 = vunpack.c.l.b16 %v326
        %v342 = vunpack.c.l.b16 %v327
        %v343 = vunpack.c.l.b16 %v328
        %v344 = vpack.c.b16 %v341, %v340
        %v345 = vpack.c.b16 %v343, %v342
        %vm348 = vcmask 261120
        %v350 = vsel %vm348, %v317, 0
        %v353 = vsel %vm348, %v318, 0
        %v356 = vsel %vm348, %v319, 0
        %v359 = vsel %vm348, %v320, 0
        %v362 = vsel %vm348, %v321, 0
        %v365 = vsel %vm348, %v322, 0
        %v368 = vsel %vm348, %v323, 0
        %v371 = vsel %vm348, %v324, 0
        %373 = vmatprep.subr.bf16.mxu0 0
        %374 = vmatpush1.bf16.msra.mxu0 %v344
        %375 = vmatprep.subr.bf16.mxu0 0
        %376 = vmatpush1.bf16.msra.mxu0 %v345
        %377 = vmatprep.subr.bf16.mxu0 0
        %378 = vmatpush1.bf16.msra.mxu0 0
        %379 = vmatprep.subr.bf16.mxu0 0
        %380 = vmatpush1.bf16.msra.mxu0 0
        %381 = vmatprep.subr.bf16.mxu0 0
        %382 = vmatpush1.bf16.msra.mxu0 0
        %383 = vmatprep.subr.bf16.mxu0 0
        %384 = vmatpush1.bf16.msra.mxu0 0
        %385 = vmatprep.subr.bf16.mxu0 0
        %386 = vmatpush1.bf16.msra.mxu0 0
        %387 = vmatprep.subr.bf16.mxu0 0
        %388 = vmatpush1.bf16.msra.mxu0 0
        %389 = vmatprep.subr.bf16.mxu0 0
        %390 = vmatpush1.bf16.msra.mxu0 0
        %391 = vmatprep.subr.bf16.mxu0 0
        %392 = vmatpush1.bf16.msra.mxu0 0
        %393 = vmatprep.subr.bf16.mxu0 0
        %394 = vmatpush1.bf16.msra.mxu0 0
        %395 = vmatprep.subr.bf16.mxu0 0
        %396 = vmatpush1.bf16.msra.mxu0 0
        %397 = vmatprep.subr.bf16.mxu0 0
        %398 = vmatpush1.bf16.msra.mxu0 0
        %399 = vmatprep.subr.bf16.mxu0 0
        %400 = vmatpush1.bf16.msra.mxu0 0
        %401 = vmatprep.subr.bf16.mxu0 0
        %402 = vmatpush1.bf16.msra.mxu0 0
        %403 = vmatprep.subr.bf16.mxu0 0
        %404 = vmatpush1.bf16.msra.mxu0 0
        %405 = vmatprep.mubr.bf16.mxu0 0
        %406 = vmatmul.mubr.bf16.gmra.mrb[0].mxu0 %v350
        %v407 = vpop.f32.mrb[0].mxu0
        %v408 = vadd.f32 %v334, %v407
        %v409 = vpop.f32.mrb[0].mxu0
        %v410 = vpop.f32.mrb[0].mxu0
        %v411 = vadd.f32 %v334, %v410
        %v412 = vpop.f32.mrb[0].mxu0
        %413 = vmatprep.mubr.bf16.mxu0 0
        %414 = vmatmul.mubr.bf16.gmra.mrb[0].mxu0 %v353
        %v415 = vpop.f32.mrb[0].mxu0
        %v416 = vadd.f32 %v334, %v415
        %v417 = vpop.f32.mrb[0].mxu0
        %v418 = vpop.f32.mrb[0].mxu0
        %v419 = vadd.f32 %v334, %v418
        %v420 = vpop.f32.mrb[0].mxu0
        %421 = vmatprep.mubr.bf16.mxu0 0
        %422 = vmatmul.mubr.bf16.gmra.mrb[0].mxu0 %v356
        %v423 = vpop.f32.mrb[0].mxu0
        %v424 = vadd.f32 %v334, %v423
        %v425 = vpop.f32.mrb[0].mxu0
        %v426 = vpop.f32.mrb[0].mxu0
        %v427 = vadd.f32 %v334, %v426
        %v428 = vpop.f32.mrb[0].mxu0
        %429 = vmatprep.mubr.bf16.mxu0 0
        %430 = vmatmul.mubr.bf16.gmra.mrb[0].mxu0 %v359
        %v431 = vpop.f32.mrb[0].mxu0
        %v432 = vadd.f32 %v334, %v431
        %v433 = vpop.f32.mrb[0].mxu0
        %v434 = vpop.f32.mrb[0].mxu0
        %v435 = vadd.f32 %v334, %v434
        %v436 = vpop.f32.mrb[0].mxu0
        %437 = vmatprep.mubr.bf16.mxu0 0
        %438 = vmatmul.mubr.bf16.gmra.mrb[0].mxu0 %v362
        %v439 = vpop.f32.mrb[0].mxu0
        %v440 = vadd.f32 %v334, %v439
        %v441 = vpop.f32.mrb[0].mxu0
        %v442 = vpop.f32.mrb[0].mxu0
        %v443 = vadd.f32 %v334, %v442
        %v444 = vpop.f32.mrb[0].mxu0
        %445 = vmatprep.mubr.bf16.mxu0 0
        %446 = vmatmul.mubr.bf16.gmra.mrb[0].mxu0 %v365
        %v447 = vpop.f32.mrb[0].mxu0
        %v448 = vadd.f32 %v334, %v447
        %v449 = vpop.f32.mrb[0].mxu0
        %v450 = vpop.f32.mrb[0].mxu0
        %v451 = vadd.f32 %v334, %v450
        %v452 = vpop.f32.mrb[0].mxu0
        %453 = vmatprep.mubr.bf16.mxu0 0
        %454 = vmatmul.mubr.bf16.gmra.mrb[0].mxu0 %v368
        %v455 = vpop.f32.mrb[0].mxu0
        %v456 = vadd.f32 %v334, %v455
        %v457 = vpop.f32.mrb[0].mxu0
        %v458 = vpop.f32.mrb[0].mxu0
        %v459 = vadd.f32 %v334, %v458
        %v460 = vpop.f32.mrb[0].mxu0
        %461 = vmatprep.mubr.bf16.mxu0 0
        %462 = vmatmul.mubr.bf16.gmra.mrb[0].mxu0 %v371
        %v463 = vpop.f32.mrb[0].mxu0
        %v464 = vadd.f32 %v334, %v463
        %v465 = vpop.f32.mrb[0].mxu0
        %v466 = vpop.f32.mrb[0].mxu0
        %v467 = vadd.f32 %v334, %v466
        %v468 = vpop.f32.mrb[0].mxu0
        %469 = vdwg.mxu0
        %v470 = vmax.f32 %v408, 0.0
        %v471 = vmax.f32 %v411, 0.0
        %v472 = vmax.f32 %v416, 0.0
        %v473 = vmax.f32 %v419, 0.0
        %v474 = vmax.f32 %v424, 0.0
        %v475 = vmax.f32 %v427, 0.0
        %v476 = vmax.f32 %v432, 0.0
        %v477 = vmax.f32 %v435, 0.0
        %v478 = vmax.f32 %v440, 0.0
        %v479 = vmax.f32 %v443, 0.0
        %v480 = vmax.f32 %v448, 0.0
        %v481 = vmax.f32 %v451, 0.0
        %v482 = vmax.f32 %v456, 0.0
        %v483 = vmax.f32 %v459, 0.0
        %v484 = vmax.f32 %v464, 0.0
        %v485 = vmax.f32 %v467, 0.0
        %v486 = vpack.c.bf16 %v471, %v470
        %v487 = vpack.c.bf16 %v473, %v472
        %v488 = vpack.c.bf16 %v475, %v474
        %v489 = vpack.c.bf16 %v477, %v476
        %v490 = vpack.c.bf16 %v479, %v478
        %v491 = vpack.c.bf16 %v481, %v480
        %v492 = vpack.c.bf16 %v483, %v482
        %v493 = vpack.c.bf16 %v485, %v484
        %v494 = vld [vmem:[%s3] sm:$0xf]
        %v495 = vld [vmem:[%s3 + $0x4] sm:$0xf]
        %v496 = vld [vmem:[%s3 + $0x8] sm:$0xf]
        %v497 = vld [vmem:[%s3 + $0xc] sm:$0xf]
        %v498 = vld [vmem:[%s3 + $0x10] sm:$0xf]
        %v499 = vld [vmem:[%s3 + $0x14] sm:$0xf]
        %v500 = vld [vmem:[%s3 + $0x18] sm:$0xf]
        %v501 = vld [vmem:[%s3 + $0x1c] sm:$0xf]
        %v502 = vld [vmem:[%s4] sm:$0x1]
        %v504 = vlaneseq
        %v505 = vshrl.u32 %v504, 7
        %v506 = vsub.s32 0, %v505
        %v507 = vrot.slane %v502, %v506
        %v517 = vunpack.c.l.b16 %v494
        %v518 = vunpack.c.l.b16 %v495
        %v519 = vunpack.c.l.b16 %v496
        %v520 = vunpack.c.l.b16 %v497
        %v521 = vunpack.c.l.b16 %v498
        %v522 = vunpack.c.l.b16 %v499
        %v523 = vunpack.c.l.b16 %v500
        %v524 = vunpack.c.l.b16 %v501
        %v525 = vpack.c.b16 %v518, %v517
        %v526 = vpack.c.b16 %v520, %v519
        %v527 = vpack.c.b16 %v522, %v521
        %v528 = vpack.c.b16 %v524, %v523
        %vm533 = vcmask 523264
        %v535 = vsel %vm533, %v486, 0
        %v538 = vsel %vm533, %v487, 0
        %v541 = vsel %vm533, %v488, 0
        %v544 = vsel %vm533, %v489, 0
        %v547 = vsel %vm533, %v490, 0
        %v550 = vsel %vm533, %v491, 0
        %v553 = vsel %vm533, %v492, 0
        %v556 = vsel %vm533, %v493, 0
        %558 = vmatprep.subr.bf16.mxu0 0
        %559 = vmatpush1.bf16.msra.mxu0 %v525
        %560 = vmatprep.subr.bf16.mxu0 0
        %561 = vmatpush1.bf16.msra.mxu0 %v526
        %562 = vmatprep.subr.bf16.mxu0 0
        %563 = vmatpush1.bf16.msra.mxu0 %v527
        %564 = vmatprep.subr.bf16.mxu0 0
        %565 = vmatpush1.bf16.msra.mxu0 %v528
        %566 = vmatprep.subr.bf16.mxu0 0
        %567 = vmatpush1.bf16.msra.mxu0 0
        %568 = vmatprep.subr.bf16.mxu0 0
        %569 = vmatpush1.bf16.msra.mxu0 0
        %570 = vmatprep.subr.bf16.mxu0 0
        %571 = vmatpush1.bf16.msra.mxu0 0
        %572 = vmatprep.subr.bf16.mxu0 0
        %573 = vmatpush1.bf16.msra.mxu0 0
        %574 = vmatprep.subr.bf16.mxu0 0
        %575 = vmatpush1.bf16.msra.mxu0 0
        %576 = vmatprep.subr.bf16.mxu0 0
        %577 = vmatpush1.bf16.msra.mxu0 0
        %578 = vmatprep.subr.bf16.mxu0 0
        %579 = vmatpush1.bf16.msra.mxu0 0
        %580 = vmatprep.subr.bf16.mxu0 0
        %581 = vmatpush1.bf16.msra.mxu0 0
        %582 = vmatprep.subr.bf16.mxu0 0
        %583 = vmatpush1.bf16.msra.mxu0 0
        %584 = vmatprep.subr.bf16.mxu0 0
        %585 = vmatpush1.bf16.msra.mxu0 0
        %586 = vmatprep.subr.bf16.mxu0 0
        %587 = vmatpush1.bf16.msra.mxu0 0
        %588 = vmatprep.subr.bf16.mxu0 0
        %589 = vmatpush1.bf16.msra.mxu0 0
        %590 = vmatprep.mubr.bf16.mxu0 0
        %591 = vmatmul.mubr.bf16.gmra.mrb[0].mxu0 %v535
        %v592 = vpop.f32.mrb[0].mxu0
        %v593 = vadd.f32 %v507, %v592
        %v594 = vpop.f32.mrb[0].mxu0
        %v595 = vpop.f32.mrb[0].mxu0
        %v596 = vadd.f32 %v507, %v595
        %v597 = vpop.f32.mrb[0].mxu0
        %598 = vmatprep.mubr.bf16.mxu0 0
        %599 = vmatmul.mubr.bf16.gmra.mrb[0].mxu0 %v538
        %v600 = vpop.f32.mrb[0].mxu0
        %v601 = vadd.f32 %v507, %v600
        %v602 = vpop.f32.mrb[0].mxu0
        %v603 = vpop.f32.mrb[0].mxu0
        %v604 = vadd.f32 %v507, %v603
        %v605 = vpop.f32.mrb[0].mxu0
        %606 = vmatprep.mubr.bf16.mxu0 0
        %607 = vmatmul.mubr.bf16.gmra.mrb[0].mxu0 %v541
        %v608 = vpop.f32.mrb[0].mxu0
        %v609 = vadd.f32 %v507, %v608
        %v610 = vpop.f32.mrb[0].mxu0
        %v611 = vpop.f32.mrb[0].mxu0
        %v612 = vadd.f32 %v507, %v611
        %v613 = vpop.f32.mrb[0].mxu0
        %614 = vmatprep.mubr.bf16.mxu0 0
        %615 = vmatmul.mubr.bf16.gmra.mrb[0].mxu0 %v544
        %v616 = vpop.f32.mrb[0].mxu0
        %v617 = vadd.f32 %v507, %v616
        %v618 = vpop.f32.mrb[0].mxu0
        %v619 = vpop.f32.mrb[0].mxu0
        %v620 = vadd.f32 %v507, %v619
        %v621 = vpop.f32.mrb[0].mxu0
        %622 = vmatprep.mubr.bf16.mxu0 0
        %623 = vmatmul.mubr.bf16.gmra.mrb[0].mxu0 %v547
        %v624 = vpop.f32.mrb[0].mxu0
        %v625 = vadd.f32 %v507, %v624
        %v626 = vpop.f32.mrb[0].mxu0
        %v627 = vpop.f32.mrb[0].mxu0
        %v628 = vadd.f32 %v507, %v627
        %v629 = vpop.f32.mrb[0].mxu0
        %630 = vmatprep.mubr.bf16.mxu0 0
        %631 = vmatmul.mubr.bf16.gmra.mrb[0].mxu0 %v550
        %v632 = vpop.f32.mrb[0].mxu0
        %v633 = vadd.f32 %v507, %v632
        %v634 = vpop.f32.mrb[0].mxu0
        %v635 = vpop.f32.mrb[0].mxu0
        %v636 = vadd.f32 %v507, %v635
        %v637 = vpop.f32.mrb[0].mxu0
        %638 = vmatprep.mubr.bf16.mxu0 0
        %639 = vmatmul.mubr.bf16.gmra.mrb[0].mxu0 %v553
        %v640 = vpop.f32.mrb[0].mxu0
        %v641 = vadd.f32 %v507, %v640
        %v642 = vpop.f32.mrb[0].mxu0
        %v643 = vpop.f32.mrb[0].mxu0
        %v644 = vadd.f32 %v507, %v643
        %v645 = vpop.f32.mrb[0].mxu0
        %646 = vmatprep.mubr.bf16.mxu0 0
        %647 = vmatmul.mubr.bf16.gmra.mrb[0].mxu0 %v556
        %v648 = vpop.f32.mrb[0].mxu0
        %v649 = vadd.f32 %v507, %v648
        %v650 = vpop.f32.mrb[0].mxu0
        %v651 = vpop.f32.mrb[0].mxu0
        %v652 = vadd.f32 %v507, %v651
        %v653 = vpop.f32.mrb[0].mxu0
        %654 = vdwg.mxu0
        %v655 = vmax.f32 %v593, 0.0
        %v656 = vmax.f32 %v596, 0.0
        %v657 = vmax.f32 %v601, 0.0
        %v658 = vmax.f32 %v604, 0.0
        %v659 = vmax.f32 %v609, 0.0
        %v660 = vmax.f32 %v612, 0.0
        %v661 = vmax.f32 %v617, 0.0
        %v662 = vmax.f32 %v620, 0.0
        %v663 = vmax.f32 %v625, 0.0
        %v664 = vmax.f32 %v628, 0.0
        %v665 = vmax.f32 %v633, 0.0
        %v666 = vmax.f32 %v636, 0.0
        %v667 = vmax.f32 %v641, 0.0
        %v668 = vmax.f32 %v644, 0.0
        %v669 = vmax.f32 %v649, 0.0
        %v670 = vmax.f32 %v652, 0.0
        %v671 = vpack.c.bf16 %v656, %v655
        %v672 = vpack.c.bf16 %v658, %v657
        %v673 = vpack.c.bf16 %v660, %v659
        %v674 = vpack.c.bf16 %v662, %v661
        %v675 = vpack.c.bf16 %v664, %v663
        %v676 = vpack.c.bf16 %v666, %v665
        %v677 = vpack.c.bf16 %v668, %v667
        %v678 = vpack.c.bf16 %v670, %v669
        %v679 = vld [vmem:[%s5] sm:$0xf]
        %v680 = vld [vmem:[#allocation2] sm:$0x1]
        %v682 = vsel %vm348, %v679, 0
        %v685 = vsel %vm348, %v671, 0
        %v688 = vsel %vm348, %v672, 0
        %v691 = vsel %vm348, %v673, 0
        %v694 = vsel %vm348, %v674, 0
        %v697 = vsel %vm348, %v675, 0
        %v700 = vsel %vm348, %v676, 0
        %v703 = vsel %vm348, %v677, 0
        %v706 = vsel %vm348, %v678, 0
        %708 = vmatprep.subr.bf16.mxu0 0
        %709 = vmatpush1.bf16.xpose.msra.mxu0 %v685
        %710 = vmatprep.subr.bf16.mxu0 0
        %711 = vmatpush1.bf16.xpose.msra.mxu0 %v688
        %712 = vmatprep.subr.bf16.mxu0 0
        %713 = vmatpush1.bf16.xpose.msra.mxu0 %v691
        %714 = vmatprep.subr.bf16.mxu0 0
        %715 = vmatpush1.bf16.xpose.msra.mxu0 %v694
        %716 = vmatprep.subr.bf16.mxu0 0
        %717 = vmatpush1.bf16.xpose.msra.mxu0 %v697
        %718 = vmatprep.subr.bf16.mxu0 0
        %719 = vmatpush1.bf16.xpose.msra.mxu0 %v700
        %720 = vmatprep.subr.bf16.mxu0 0
        %721 = vmatpush1.bf16.xpose.msra.mxu0 %v703
        %722 = vmatprep.subr.bf16.mxu0 0
        %723 = vmatpush1.bf16.xpose.msra.mxu0 %v706
        %724 = vmatprep.subr.bf16.mxu0 0
        %725 = vmatpush1.bf16.xpose.msra.mxu0 0
        %726 = vmatprep.subr.bf16.mxu0 0
        %727 = vmatpush1.bf16.xpose.msra.mxu0 0
        %728 = vmatprep.subr.bf16.mxu0 0
        %729 = vmatpush1.bf16.xpose.msra.mxu0 0
        %730 = vmatprep.subr.bf16.mxu0 0
        %731 = vmatpush1.bf16.xpose.msra.mxu0 0
        %732 = vmatprep.subr.bf16.mxu0 0
        %733 = vmatpush1.bf16.xpose.msra.mxu0 0
        %734 = vmatprep.subr.bf16.mxu0 0
        %735 = vmatpush1.bf16.xpose.msra.mxu0 0
        %736 = vmatprep.subr.bf16.mxu0 0
        %737 = vmatpush1.bf16.xpose.msra.mxu0 0
        %738 = vmatprep.subr.bf16.mxu0 0
        %739 = vmatpush1.bf16.xpose.msra.mxu0 0
        %740 = vmatprep.mubr.bf16.mxu0 0
        %741 = vmatmul.mubr.bf16.gmra.mrb[0].mxu0 %v682
        %v742 = vpop.f32.mrb[0].mxu0
        %v743 = vadd.f32 0.0, %v742
        %v744 = vpop.f32.mrb[0].mxu0
        %v745 = vpop.f32.mrb[0].mxu0
        %v746 = vpop.f32.mrb[0].mxu0
        %747 = vdwg.mxu0
        %749 = vset.pattern.permute.xlu0 0
        %750 = vperm.xlu0 %749, %v680
        %v751 = vpop.permute.xlu0 %750
        %v753 = vlaneseq
        %v754 = vshrl.u32 %v753, 7
        %v755 = vsub.s32 0, %v754
        %v756 = vrot.slane %v751, %v755
        %v757 = vadd.f32 %v743, %v756
        %758 = vst [vmem:[%s285] sm:$0x1] %v757
        %s759 = sand.u32 %s183, 1
        %s760 = scalar_lea.sflag [#allocation4], %s759
        %s761 = sand.u32 %s183, 1
        %s762 = scalar_lea.vmem [#allocation3], %s761
        // Predicated region
        $region49: #{tower_forward.1} parent=47 // pred_check
          %p763 = pneg %p193
        $region50: #{tower_forward.1} parent=47 // pred_check_branch
          %765 = sbr.rel (%p763) target = $region52
        $region51: #{tower_forward.1} parent=47 // pred_region
          %s767 = ssub.s32 16, 16
          %768 = vsyncadd %s760, %s767
          %s769 = smul.addr %s23, 16
          %s770 = scalar_lea.hbm %s7, %s769
          %s772 = sshll.u32 %s762, 4
          %s773 = int_to_ptr.vmem [resolvable:$true] %s772
          %775 = dma.vmem_to_hbm [thread:$0]  %s773, 16, %s770, %s760
        $region52: #{tower_forward.1} parent=47 // pred_fallthru
          _
      $region48: #{tower_forward.1} parent=5 // pred_fallthru
        _
      %p776 = scmp.le.s32.totalorder 2, %s18
      // Predicated region
      $region53: #{tower_forward.1} parent=5 // pred_check
        %p777 = pneg %p776
      $region54: #{tower_forward.1} parent=5 // pred_check_branch
        %779 = sbr.rel (%p777) target = $region56
      $region55: #{tower_forward.1} parent=5 // pred_region
        %s780 = ssub.s32 %s18, 2
        // Predicated region
        $region57: #{tower_forward.1} parent=55 // pred_check
          %p781 = pneg %p199
        $region58: #{tower_forward.1} parent=55 // pred_check_branch
          %783 = sbr.rel (%p781) target = $region60
        $region59: #{tower_forward.1} parent=55 // pred_region
          %s784 = sand.u32 %s184, 1
          %s785 = scalar_lea.sflag [#allocation4], %s784
          %s786 = sand.u32 %s184, 1
          %s787 = scalar_lea.vmem [#allocation3], %s786
          %788 = dma.done %s785, 16
        $region60: #{tower_forward.1} parent=55 // pred_fallthru
          _
      $region56: #{tower_forward.1} parent=5 // pred_fallthru
        _
    $region6: #{tower_forward.1} parent=1 // loop_footer
      %s22 = sadd.s32 1, %s18
    $region7: #{tower_forward.1} parent=1 // loop_footer_branch
      %17 = sbr.rel target = $region3
    $region8: #{tower_forward.1} parent=1 // loop_exit
      _
    %789 = vsyncpa [#allocation4], 1
    %s790 = scalar_lea.sflag [#allocation4], 1
    %791 = vsyncpa %s790, 1

</llo_original>
